<compile_context>
chip_gen: v7x
topology: tpu7x:2x2x1
jax: 0.10.0
libtpu: 0.0.40
codegen_flags: <defaults>
</compile_context>

<pallas_src>
import functools

import jax
import jax.numpy as jnp
from jax import lax
from jax.experimental import pallas as pl
from jax.experimental.pallas import tpu as pltpu

_NEG = -1e30        # finite "masked logit" value; only ever lives in f32
_LANES = 128
_ROW_CHUNK = 128    # in-kernel softmax sub-chunk -> bounded vreg pressure


def _round_up(x, m):
    return ((x + m - 1) // m) * m


# ---------------------------------------------------------------------------
# One-time preparation (hoisted: weights are static for inference).
# ---------------------------------------------------------------------------
def prepare_ensemble(weights_stack, biases_stack, accuracies):
    """weights_stack: (M, D, C) per-model linear weights (y = x @ W_m + b_m)
       biases_stack:  (M, 1, C)
       accuracies:    (M,) -> normalized ensemble weights (as in __init__)."""
    M, D, C = weights_stack.shape
    MC = M * C
    N = _round_up(MC, _LANES)       # packed folded width (30 -> 128, not M*128)
    C_out = _round_up(C, _LANES)    # lane-dense output width

    # Fold all heads into one (D, N) bf16 operand; model m owns lanes
    # [m*C, (m+1)*C).  MXU accumulates in f32.
    w_fold = jnp.zeros((D, N), jnp.float32).at[:, :MC].set(
        jnp.transpose(weights_stack.astype(jnp.float32), (1, 0, 2)).reshape(D, MC)
    ).astype(jnp.bfloat16)

    # Biases stay f32; padded lanes are masked in-kernel (no -inf sentinel).
    b_fold = jnp.zeros((1, N), jnp.float32).at[:, :MC].set(
        biases_stack.astype(jnp.float32).reshape(1, MC))

    # Normalized ensemble weights, baked into the fold matrix:
    # output column c = sum_m ens_w[m] * probs_m[c].
    ens_w = jnp.asarray(accuracies, jnp.float32)
    ens_w = ens_w / jnp.sum(ens_w)
    rows = jnp.arange(MC)
    fold = jnp.zeros((N, C_out), jnp.float32).at[rows, rows % C].set(
        ens_w[rows // C])

    return dict(w_fold=w_fold, b_fold=b_fold, fold=fold, ens_w=ens_w,
                num_models=M, in_features=D, num_classes=C,
                folded_width=N, out_width=C_out)


# ---------------------------------------------------------------------------
# Kernel
# ---------------------------------------------------------------------------
def _ensemble_kernel(x_ref, w_ref, b_ref, fold_ref, o_ref, *,
                     num_models, num_classes):
    # x_ref:    VMEM (TB, D)   bf16 batch tile
    # w_ref:    VMEM (D, N)    bf16 folded weights (model m -> lanes [m*C,(m+1)*C))
    # b_ref:    VMEM (1, N)    f32 folded biases
    # fold_ref: VMEM (N, Co)   f32 fold matrix: (m*C+c, c) = ens_w[m]
    # o_ref:    VMEM (TB, Co)  f32 weighted ensemble probabilities
    tb = x_ref.shape[0]

    # Process <=128-row sub-chunks so the (rows, N) f32 temporaries stay ~16
    # vregs each; this lets the batch tile grow to 256 without spills.
    for r0 in range(0, tb, _ROW_CHUNK):
        rows = min(_ROW_CHUNK, tb - r0)
        xs = x_ref[pl.ds(r0, rows), :]
        logits = jnp.dot(xs, w_ref[...],
                         preferred_element_type=jnp.float32) + b_ref[...]
        lane = lax.broadcasted_iota(jnp.int32, logits.shape, 1)

        acc = None
        for m in range(num_models):              # M is small & static
            lo = m * num_classes
            seg = (lane >= lo) & (lane < lo + num_classes)
            lm = jnp.where(seg, logits, _NEG)    # mask other models / pad lanes
            e = jnp.exp(lm - jnp.max(lm, axis=1, keepdims=True))  # 0 off-segment
            inv = pl.reciprocal(jnp.sum(e, axis=1, keepdims=True), approx=True)
            contrib = e * inv                    # per-model softmax (packed lanes)
            acc = contrib if m == 0 else acc + contrib

        # Tiny lane-dense MXU pass: applies ensemble weights AND sums lane
        # m*C+c into output column c -> unmasked 128-wide stores.
        o_ref[pl.ds(r0, rows), :] = jnp.dot(
            acc, fold_ref[...], preferred_element_type=jnp.float32)


# ---------------------------------------------------------------------------
# Tiling policy + pallas_call builder
# ---------------------------------------------------------------------------
def _choose_batch_tiling(batch):
    """Returns (padded_batch, batch_tile, grid_steps)."""
    if batch < 32:
        # One full-array tile: no (8,128) padding needed, no wasted rows.
        return batch, batch, 1
    if batch <= 512:
        # >=2 parallel steps so both v7x TensorCores get work; tile is a
        # multiple of 16 (packed-bf16 sublane density, v5e-friendly).
        padded = _round_up(batch, 32)
        return padded, padded // 2, 2
    # Large batch: 256-row tiles (v6e/v7x MXU fill, halves per-step overhead).
    padded = _round_up(batch, 256)
    return padded, 256, padded // 256


def _build_call(params, padded_batch, batch_tile, grid_steps, single_buffer_consts):
    M = params["num_models"]
    D = params["in_features"]
    C = params["num_classes"]
    N = params["folded_width"]
    C_out = params["out_width"]

    const_kw = {}
    if single_buffer_consts:
        # Grid-invariant operands: skip the useless second DMA buffer.
        const_kw = dict(pipeline_mode=pl.Buffered(1))

    kernel = functools.partial(_ensemble_kernel, num_models=M, num_classes=C)

    flops = 2 * padded_batch * D * N + 2 * padded_batch * N * C_out
    transcendentals = padded_batch * N * M          # exps (+ reciprocals)
    bytes_accessed = (padded_batch * D * 2 + D * N * 2 + N * 4
                      + N * C_out * 4 + padded_batch * C_out * 4)

    return pl.pallas_call(
        kernel,
        out_shape=jax.ShapeDtypeStruct((padded_batch, C_out), jnp.float32),
        grid_spec=pltpu.PrefetchScalarGridSpec(
            num_scalar_prefetch=0,
            grid=(grid_steps,),                      # independent batch tiles
            in_specs=[
                pl.BlockSpec((batch_tile, D), lambda i: (i, 0)),
                pl.BlockSpec((D, N), lambda i: (0, 0), **const_kw),
                pl.BlockSpec((1, N), lambda i: (0, 0), **const_kw),
                pl.BlockSpec((N, C_out), lambda i: (0, 0), **const_kw),
            ],
            out_specs=pl.BlockSpec((batch_tile, C_out), lambda i: (i, 0)),
        ),
        compiler_params=pltpu.CompilerParams(
            dimension_semantics=("parallel",)),
        cost_estimate=pl.CostEstimate(flops=flops,
                                      transcendentals=transcendentals,
                                      bytes_accessed=bytes_accessed),
    )


def ensemble_forward(params, x):
    """x: (B, Cin, H, W) -> (B, C) weighted ensemble probabilities."""
    B = x.shape[0]
    D = params["in_features"]
    C = params["num_classes"]
    x2d = x.reshape(B, D).astype(jnp.bfloat16)

    padded_batch, batch_tile, grid_steps = _choose_batch_tiling(B)
    if padded_batch != B:
        x2d = jnp.zeros((padded_batch, D), jnp.bfloat16).at[:B].set(x2d)

    args = (x2d, params["w_fold"], params["b_fold"], params["fold"])
    use_single_buffer = grid_steps > 1
    try:
        out = _build_call(params, padded_batch, batch_tile, grid_steps,
                          use_single_buffer)(*args)
    except Exception:
        if not use_single_buffer:
            raise
        # Fallback if this JAX build rejects pipeline_mode=pl.Buffered(1).
        out = _build_call(params, padded_batch, batch_tile, grid_steps,
                          False)(*args)

    return out[:B, :C]


# ---------------------------------------------------------------------------
if __name__ == "__main__":
    # Small shapes consistent with the module: 3 linear "models", image input.
    B, Cin, H, W = 2, 4, 16, 16
    NUM_CLASSES = 10
    M = 3
    D = Cin * H * W

    key = jax.random.PRNGKey(0)
    kx, kw, kb = jax.random.split(key, 3)

    x = jax.random.normal(kx, (B, Cin, H, W), dtype=jnp.float32)
    W_stack = jax.random.normal(kw, (M, D, NUM_CLASSES), dtype=jnp.float32) * 0.02
    b_stack = jax.random.normal(kb, (M, 1, NUM_CLASSES), dtype=jnp.float32) * 0.01
    accuracies = [0.80, 0.90, 0.85]

    # One-time prep (hoisted out of the forward path).
    params = prepare_ensemble(W_stack, b_stack, accuracies)
    params = jax.tree_util.tree_map(
        lambda a: jax.block_until_ready(a) if isinstance(a, jax.Array) else a,
        params)

    out = ensemble_forward(params, x)
    out = jax.block_until_ready(out)

    # Pure-JAX reference (same bf16 matmul inputs, f32 softmax/accumulation).
    x2d_ref = x.reshape(B, D).astype(jnp.bfloat16).astype(jnp.float32)
    W_ref = W_stack.astype(jnp.bfloat16).astype(jnp.float32)
    logits_ref = jnp.einsum("bd,mdc->mbc", x2d_ref, W_ref) + b_stack
    probs_ref = jax.nn.softmax(logits_ref, axis=-1)
    ens_w = jnp.asarray(accuracies, jnp.float32)
    ens_w = ens_w / jnp.sum(ens_w)
    ref = jnp.einsum("m,mbc->bc", ens_w, probs_ref)

    assert out.shape == (B, NUM_CLASSES), out.shape
    max_err = float(jnp.max(jnp.abs(out - ref)))
    assert max_err < 2e-3, f"mismatch: max abs err {max_err}"

    print("KERNEL_OK")
</pallas_src>

<mosaic_0001>
module attributes {stable_mosaic.version = 11 : i64} {
  func.func @_ensemble_kernel(%arg0: i32, %arg1: memref<2x1024xbf16, #tpu.memory_space<vmem>>, %arg2: memref<1024x128xbf16, #tpu.memory_space<vmem>>, %arg3: memref<1x128xf32, #tpu.memory_space<vmem>>, %arg4: memref<128x128xf32, #tpu.memory_space<vmem>>, %arg5: memref<2x128xf32, #tpu.memory_space<vmem>>) attributes {dimension_semantics = [#tpu.dimension_semantics<parallel>], iteration_bounds = array<i64: 1>, scalar_prefetch = 0 : i64, scratch_operands = 0 : i64, tpu.core_type = #tpu.core_type<tc>, window_params = [{transform_indices = @transform_0, window_bounds = array<i64: 2, 1024>}, {pipeline_mode = #tpu.pipeline_mode<synchronous>, transform_indices = @transform_1, window_bounds = array<i64: 1024, 128>}, {pipeline_mode = #tpu.pipeline_mode<synchronous>, transform_indices = @transform_2, window_bounds = array<i64: 1, 128>}, {pipeline_mode = #tpu.pipeline_mode<synchronous>, transform_indices = @transform_3, window_bounds = array<i64: 128, 128>}, {transform_indices = @transform_4, window_bounds = array<i64: 2, 128>}]} {
    %c0 = arith.constant 0 : index
    %c0_0 = arith.constant 0 : index
    %0 = vector.load %arg1[%c0, %c0_0] : memref<2x1024xbf16, #tpu.memory_space<vmem>>, vector<2x1024xbf16>
    %c0_1 = arith.constant 0 : index
    %c0_2 = arith.constant 0 : index
    %1 = vector.load %arg2[%c0_1, %c0_2] : memref<1024x128xbf16, #tpu.memory_space<vmem>>, vector<1024x128xbf16>
    %cst = arith.constant dense<0.000000e+00> : vector<2x128xf32>
    %2 = tpu.matmul %0, %1, %cst {dimension_numbers = #tpu.dot_dimension_numbers<[1], [0], [0], [1], [0, 0, 1, 1], [], []>} : vector<2x1024xbf16>, vector<1024x128xbf16>, vector<2x128xf32> -> vector<2x128xf32>
    %c0_3 = arith.constant 0 : index
    %c0_4 = arith.constant 0 : index
    %3 = vector.load %arg3[%c0_3, %c0_4] : memref<1x128xf32, #tpu.memory_space<vmem>>, vector<1x128xf32>
    %4 = vector.broadcast %3 : vector<1x128xf32> to vector<2x128xf32>
    %5 = arith.addf %2, %4 : vector<2x128xf32>
    %6 = tpu.iota {dimensions = array<i32: 1>} : vector<2x128xi32>
    %c0_i32 = arith.constant 0 : i32
    %7 = vector.broadcast %c0_i32 : i32 to vector<2x128xi32>
    %8 = arith.cmpi sge, %6, %7 : vector<2x128xi32>
    %c10_i32 = arith.constant 10 : i32
    %9 = vector.broadcast %c10_i32 : i32 to vector<2x128xi32>
    %10 = arith.cmpi slt, %6, %9 : vector<2x128xi32>
    %11 = arith.andi %8, %10 : vector<2x128xi1>
    %cst_5 = arith.constant -1.000000e+30 : f32
    %12 = vector.broadcast %cst_5 : f32 to vector<2x128xf32>
    %13 = arith.select %11, %5, %12 : vector<2x128xi1>, vector<2x128xf32>
    %cst_6 = arith.constant dense<0xFF800000> : vector<2xf32>
    %14 = vector.multi_reduction <maximumf>, %13, %cst_6 [1] : vector<2x128xf32> to vector<2xf32>
    %15 = vector.shape_cast %14 : vector<2xf32> to vector<2x1xf32>
    %16 = vector.broadcast %15 : vector<2x1xf32> to vector<2x128xf32>
    %17 = arith.subf %13, %16 : vector<2x128xf32>
    %18 = math.exp %17 : vector<2x128xf32>
    %cst_7 = arith.constant dense<0.000000e+00> : vector<2xf32>
    %19 = vector.multi_reduction <add>, %18, %cst_7 [1] : vector<2x128xf32> to vector<2xf32>
    %20 = vector.shape_cast %19 : vector<2xf32> to vector<2x1xf32>
    %21 = tpu.reciprocal %20 {approx = true} : vector<2x1xf32> -> vector<2x1xf32>
    %22 = vector.broadcast %21 : vector<2x1xf32> to vector<2x128xf32>
    %23 = arith.mulf %18, %22 : vector<2x128xf32>
    %c10_i32_8 = arith.constant 10 : i32
    %24 = vector.broadcast %c10_i32_8 : i32 to vector<2x128xi32>
    %25 = arith.cmpi sge, %6, %24 : vector<2x128xi32>
    %c20_i32 = arith.constant 20 : i32
    %26 = vector.broadcast %c20_i32 : i32 to vector<2x128xi32>
    %27 = arith.cmpi slt, %6, %26 : vector<2x128xi32>
    %28 = arith.andi %25, %27 : vector<2x128xi1>
    %cst_9 = arith.constant -1.000000e+30 : f32
    %29 = vector.broadcast %cst_9 : f32 to vector<2x128xf32>
    %30 = arith.select %28, %5, %29 : vector<2x128xi1>, vector<2x128xf32>
    %cst_10 = arith.constant dense<0xFF800000> : vector<2xf32>
    %31 = vector.multi_reduction <maximumf>, %30, %cst_10 [1] : vector<2x128xf32> to vector<2xf32>
    %32 = vector.shape_cast %31 : vector<2xf32> to vector<2x1xf32>
    %33 = vector.broadcast %32 : vector<2x1xf32> to vector<2x128xf32>
    %34 = arith.subf %30, %33 : vector<2x128xf32>
    %35 = math.exp %34 : vector<2x128xf32>
    %cst_11 = arith.constant dense<0.000000e+00> : vector<2xf32>
    %36 = vector.multi_reduction <add>, %35, %cst_11 [1] : vector<2x128xf32> to vector<2xf32>
    %37 = vector.shape_cast %36 : vector<2xf32> to vector<2x1xf32>
    %38 = tpu.reciprocal %37 {approx = true} : vector<2x1xf32> -> vector<2x1xf32>
    %39 = vector.broadcast %38 : vector<2x1xf32> to vector<2x128xf32>
    %40 = arith.mulf %35, %39 : vector<2x128xf32>
    %41 = arith.addf %23, %40 : vector<2x128xf32>
    %c20_i32_12 = arith.constant 20 : i32
    %42 = vector.broadcast %c20_i32_12 : i32 to vector<2x128xi32>
    %43 = arith.cmpi sge, %6, %42 : vector<2x128xi32>
    %c30_i32 = arith.constant 30 : i32
    %44 = vector.broadcast %c30_i32 : i32 to vector<2x128xi32>
    %45 = arith.cmpi slt, %6, %44 : vector<2x128xi32>
    %46 = arith.andi %43, %45 : vector<2x128xi1>
    %cst_13 = arith.constant -1.000000e+30 : f32
    %47 = vector.broadcast %cst_13 : f32 to vector<2x128xf32>
    %48 = arith.select %46, %5, %47 : vector<2x128xi1>, vector<2x128xf32>
    %cst_14 = arith.constant dense<0xFF800000> : vector<2xf32>
    %49 = vector.multi_reduction <maximumf>, %48, %cst_14 [1] : vector<2x128xf32> to vector<2xf32>
    %50 = vector.shape_cast %49 : vector<2xf32> to vector<2x1xf32>
    %51 = vector.broadcast %50 : vector<2x1xf32> to vector<2x128xf32>
    %52 = arith.subf %48, %51 : vector<2x128xf32>
    %53 = math.exp %52 : vector<2x128xf32>
    %cst_15 = arith.constant dense<0.000000e+00> : vector<2xf32>
    %54 = vector.multi_reduction <add>, %53, %cst_15 [1] : vector<2x128xf32> to vector<2xf32>
    %55 = vector.shape_cast %54 : vector<2xf32> to vector<2x1xf32>
    %56 = tpu.reciprocal %55 {approx = true} : vector<2x1xf32> -> vector<2x1xf32>
    %57 = vector.broadcast %56 : vector<2x1xf32> to vector<2x128xf32>
    %58 = arith.mulf %53, %57 : vector<2x128xf32>
    %59 = arith.addf %41, %58 : vector<2x128xf32>
    %c0_16 = arith.constant 0 : index
    %c0_17 = arith.constant 0 : index
    %60 = vector.load %arg4[%c0_16, %c0_17] : memref<128x128xf32, #tpu.memory_space<vmem>>, vector<128x128xf32>
    %cst_18 = arith.constant dense<0.000000e+00> : vector<2x128xf32>
    %61 = tpu.matmul %59, %60, %cst_18 {dimension_numbers = #tpu.dot_dimension_numbers<[1], [0], [0], [1], [0, 0, 1, 1], [], []>} : vector<2x128xf32>, vector<128x128xf32>, vector<2x128xf32> -> vector<2x128xf32>
    %c0_19 = arith.constant 0 : index
    %c0_20 = arith.constant 0 : index
    %62 = vector.load %arg5[%c0_19, %c0_20] : memref<2x128xf32, #tpu.memory_space<vmem>>, vector<2x128xf32>
    tpu.vector_store %arg5[%c0_19, %c0_20], %61 {strides = array<i32>} : memref<2x128xf32, #tpu.memory_space<vmem>>, vector<2x128xf32>,
    return
  }
  func.func @transform_0(%arg0: i32) -> (i32, i32) {
    %c0_i32 = arith.constant 0 : i32
    %c0_i32_0 = arith.constant 0 : i32
    return %arg0, %c0_i32 : i32, i32
  }
  func.func @transform_1(%arg0: i32) -> (i32, i32) {
    %c0_i32 = arith.constant 0 : i32
    %c0_i32_0 = arith.constant 0 : i32
    %c0_i32_1 = arith.constant 0 : i32
    return %c0_i32, %c0_i32_0 : i32, i32
  }
  func.func @transform_2(%arg0: i32) -> (i32, i32) {
    %c0_i32 = arith.constant 0 : i32
    %c0_i32_0 = arith.constant 0 : i32
    %c0_i32_1 = arith.constant 0 : i32
    return %c0_i32, %c0_i32_0 : i32, i32
  }
  func.func @transform_3(%arg0: i32) -> (i32, i32) {
    %c0_i32 = arith.constant 0 : i32
    %c0_i32_0 = arith.constant 0 : i32
    %c0_i32_1 = arith.constant 0 : i32
    return %c0_i32, %c0_i32_0 : i32, i32
  }
  func.func @transform_4(%arg0: i32) -> (i32, i32) {
    %c0_i32 = arith.constant 0 : i32
    %c0_i32_0 = arith.constant 0 : i32
    return %arg0, %c0_i32 : i32, i32
  }
}

</mosaic_0001>

<llo_original>
// kernel: tpu_custom_call.1
$region0: #{tpu_custom_call.1}
  #allocation0 [shape = 'u32[]', space=smem, size = 0x4, offset = 0x4, fixed_abs, tag = 'smem constant byte address 0x4 - core index']
  #allocation1 [shape = 'u32[144,128]{1,0:T(1,128)}', space=vmem, size = 0x12000, scoped, tag = 'internal scratch']
  %s0 = inlined_call_operand.hbm [shape: bf16[2,1024], index: 0, kind: input, shape index: {}]
  %s1 = inlined_call_operand.hbm [shape: bf16[1024,128], index: 1, kind: input, shape index: {}]
  %s2 = inlined_call_operand.vmem [shape: f32[1,128], index: 2, kind: input, shape index: {}]
  %s3 = inlined_call_operand.hbm [shape: f32[128,128], index: 3, kind: input, shape index: {}]
  %s4 = inlined_call_operand.hbm [shape: f32[2,128], index: 4, kind: output, shape index: {}]
  %s5 = sld [smem:[#allocation0]]
  $region38: #{tpu_custom_call.1} parent=0
    _
  %s7 = ssub.s32 1, %s5
  %s8 = scalar_select 0, %s7, %s5
  $region1: #{tpu_custom_call.1} parent=0
    #allocation2 [shape = 'u8[4096]{0}', space=vmem, size = 0x1000, scoped, tag = 'input window, operand 0, single buffered']
    #allocation3 [shape = 's32[1]{0}', space=sflag, size = 0x4, scoped, tag = 'scoped memory for tpu_custom_call.1']
    #allocation4 [shape = 's32[1]{0}', space=sflag, size = 0x4, scoped, tag = 'scoped memory for tpu_custom_call.1']
    #allocation5 [shape = 'u8[262144]{0}', space=vmem, size = 0x40000, scoped, tag = 'input window, operand 1, single buffered']
    #allocation6 [shape = 's32[1]{0}', space=sflag, size = 0x4, scoped, tag = 'scoped memory for tpu_custom_call.1']
    #allocation7 [shape = 'u8[65536]{0}', space=vmem, size = 0x10000, scoped, tag = 'input window, operand 3, single buffered']
    #allocation8 [shape = 'u8[1024]{0}', space=vmem, size = 0x400, scoped, tag = 'output window, operand 0, single buffered']
    %9 = vsyncpa [#allocation3], 0
    %10 = vsyncpa [#allocation6], 0
    %11 = vsyncpa [#allocation4], 0
    // Predicated region
    $region2: #{tpu_custom_call.1} parent=1 // pred_check
      _
    $region3: #{tpu_custom_call.1} parent=1 // pred_check_branch
      %13 = sbr.rel (0) target = $region5
    $region4: #{tpu_custom_call.1} parent=1 // pred_region
      %s15 = ssub.s32 128, 128
      %16 = vsyncadd [#allocation3], %s15
      %s18 = sshll.u32 [#allocation2], 4
      %s19 = int_to_ptr.vmem [resolvable:$true] %s18
      %21 = dma.hbm_to_vmem [thread:$0]  %s0, 128, %s19, [#allocation3]
    $region5: #{tpu_custom_call.1} parent=1 // pred_fallthru
      _
    // Predicated region
    $region6: #{tpu_custom_call.1} parent=1 // pred_check
      _
    $region7: #{tpu_custom_call.1} parent=1 // pred_check_branch
      %23 = sbr.rel (0) target = $region9
    $region8: #{tpu_custom_call.1} parent=1 // pred_region
      %s25 = ssub.s32 8192, 8192
      %26 = vsyncadd [#allocation6], %s25
      %s27 = sshll.u32 [#allocation5], 4
      %s28 = int_to_ptr.vmem [resolvable:$true] %s27
      %33 = dma.hbm_to_vmem [thread:$0]  %s1, 8192, %s28, [#allocation6], 64, 64, 4
    $region9: #{tpu_custom_call.1} parent=1 // pred_fallthru
      _
    // Predicated region
    $region10: #{tpu_custom_call.1} parent=1 // pred_check
      _
    $region11: #{tpu_custom_call.1} parent=1 // pred_check_branch
      %35 = sbr.rel (0) target = $region13
    $region12: #{tpu_custom_call.1} parent=1 // pred_region
      _
    $region13: #{tpu_custom_call.1} parent=1 // pred_fallthru
      _
    // Predicated region
    $region14: #{tpu_custom_call.1} parent=1 // pred_check
      _
    $region15: #{tpu_custom_call.1} parent=1 // pred_check_branch
      %37 = sbr.rel (0) target = $region17
    $region16: #{tpu_custom_call.1} parent=1 // pred_region
      %s39 = ssub.s32 2048, 2048
      %40 = vsyncadd [#allocation6], %s39
      %s41 = sshll.u32 [#allocation7], 4
      %s42 = int_to_ptr.vmem [resolvable:$true] %s41
      %47 = dma.hbm_to_vmem [thread:$0]  %s3, 2048, %s42, [#allocation6], 128, 128, 8
    $region17: #{tpu_custom_call.1} parent=1 // pred_fallthru
      _
    // Predicated region
    $region18: #{tpu_custom_call.1} parent=1 // pred_check
      _
    $region19: #{tpu_custom_call.1} parent=1 // pred_check_branch
      %49 = sbr.rel (0) target = $region21
    $region20: #{tpu_custom_call.1} parent=1 // pred_region
      %50 = dma.done [#allocation3], 128
    $region21: #{tpu_custom_call.1} parent=1 // pred_fallthru
      _
    // Predicated region
    $region22: #{tpu_custom_call.1} parent=1 // pred_check
      _
    $region23: #{tpu_custom_call.1} parent=1 // pred_check_branch
      %52 = sbr.rel (0) target = $region25
    $region24: #{tpu_custom_call.1} parent=1 // pred_region
      %53 = dma.done [#allocation6], 8192
    $region25: #{tpu_custom_call.1} parent=1 // pred_fallthru
      _
    // Predicated region
    $region26: #{tpu_custom_call.1} parent=1 // pred_check
      _
    $region27: #{tpu_custom_call.1} parent=1 // pred_check_branch
      %55 = sbr.rel (0) target = $region29
    $region28: #{tpu_custom_call.1} parent=1 // pred_region
      %56 = dma.done [#allocation6], 2048
    $region29: #{tpu_custom_call.1} parent=1 // pred_fallthru
      _
    %v58 = vld [vmem:[#allocation2] sm:$0xff]
    %v59 = vld [vmem:[#allocation5] sm:$0xf]
    %v60 = vld [vmem:[#allocation5 + $0x4] sm:$0xf]
    %v61 = vld [vmem:[#allocation5 + $0x8] sm:$0xf]
    %v62 = vld [vmem:[#allocation5 + $0xc] sm:$0xf]
    %v63 = vld [vmem:[#allocation5 + $0x10] sm:$0xf]
    %v64 = vld [vmem:[#allocation5 + $0x14] sm:$0xf]
    %v65 = vld [vmem:[#allocation5 + $0x18] sm:$0xf]
    %v66 = vld [vmem:[#allocation5 + $0x1c] sm:$0xf]
    %v67 = vld [vmem:[#allocation5 + $0x20] sm:$0xf]
    %v68 = vld [vmem:[#allocation5 + $0x24] sm:$0xf]
    %v69 = vld [vmem:[#allocation5 + $0x28] sm:$0xf]
    %v70 = vld [vmem:[#allocation5 + $0x2c] sm:$0xf]
    %v71 = vld [vmem:[#allocation5 + $0x30] sm:$0xf]
    %v72 = vld [vmem:[#allocation5 + $0x34] sm:$0xf]
    %v73 = vld [vmem:[#allocation5 + $0x38] sm:$0xf]
    %v74 = vld [vmem:[#allocation5 + $0x3c] sm:$0xf]
    %v75 = vld [vmem:[#allocation5 + $0x40] sm:$0xf]
    %v76 = vld [vmem:[#allocation5 + $0x44] sm:$0xf]
    %v77 = vld [vmem:[#allocation5 + $0x48] sm:$0xf]
    %v78 = vld [vmem:[#allocation5 + $0x4c] sm:$0xf]
    %v79 = vld [vmem:[#allocation5 + $0x50] sm:$0xf]
    %v80 = vld [vmem:[#allocation5 + $0x54] sm:$0xf]
    %v81 = vld [vmem:[#allocation5 + $0x58] sm:$0xf]
    %v82 = vld [vmem:[#allocation5 + $0x5c] sm:$0xf]
    %v83 = vld [vmem:[#allocation5 + $0x60] sm:$0xf]
    %v84 = vld [vmem:[#allocation5 + $0x64] sm:$0xf]
    %v85 = vld [vmem:[#allocation5 + $0x68] sm:$0xf]
    %v86 = vld [vmem:[#allocation5 + $0x6c] sm:$0xf]
    %v87 = vld [vmem:[#allocation5 + $0x70] sm:$0xf]
    %v88 = vld [vmem:[#allocation5 + $0x74] sm:$0xf]
    %v89 = vld [vmem:[#allocation5 + $0x78] sm:$0xf]
    %v90 = vld [vmem:[#allocation5 + $0x7c] sm:$0xf]
    %v91 = vld [vmem:[#allocation5 + $0x80] sm:$0xf]
    %v92 = vld [vmem:[#allocation5 + $0x84] sm:$0xf]
    %v93 = vld [vmem:[#allocation5 + $0x88] sm:$0xf]
    %v94 = vld [vmem:[#allocation5 + $0x8c] sm:$0xf]
    %v95 = vld [vmem:[#allocation5 + $0x90] sm:$0xf]
    %v96 = vld [vmem:[#allocation5 + $0x94] sm:$0xf]
    %v97 = vld [vmem:[#allocation5 + $0x98] sm:$0xf]
    %v98 = vld [vmem:[#allocation5 + $0x9c] sm:$0xf]
    %v99 = vld [vmem:[#allocation5 + $0xa0] sm:$0xf]
    %v100 = vld [vmem:[#allocation5 + $0xa4] sm:$0xf]
    %v101 = vld [vmem:[#allocation5 + $0xa8] sm:$0xf]
    %v102 = vld [vmem:[#allocation5 + $0xac] sm:$0xf]
    %v103 = vld [vmem:[#allocation5 + $0xb0] sm:$0xf]
    %v104 = vld [vmem:[#allocation5 + $0xb4] sm:$0xf]
    %v105 = vld [vmem:[#allocation5 + $0xb8] sm:$0xf]
    %v106 = vld [vmem:[#allocation5 + $0xbc] sm:$0xf]
    %v107 = vld [vmem:[#allocation5 + $0xc0] sm:$0xf]
    %v108 = vld [vmem:[#allocation5 + $0xc4] sm:$0xf]
    %v109 = vld [vmem:[#allocation5 + $0xc8] sm:$0xf]
    %v110 = vld [vmem:[#allocation5 + $0xcc] sm:$0xf]
    %v111 = vld [vmem:[#allocation5 + $0xd0] sm:$0xf]
    %v112 = vld [vmem:[#allocation5 + $0xd4] sm:$0xf]
    %v113 = vld [vmem:[#allocation5 + $0xd8] sm:$0xf]
    %v114 = vld [vmem:[#allocation5 + $0xdc] sm:$0xf]
    %v115 = vld [vmem:[#allocation5 + $0xe0] sm:$0xf]
    %v116 = vld [vmem:[#allocation5 + $0xe4] sm:$0xf]
    %v117 = vld [vmem:[#allocation5 + $0xe8] sm:$0xf]
    %v118 = vld [vmem:[#allocation5 + $0xec] sm:$0xf]
    %v119 = vld [vmem:[#allocation5 + $0xf0] sm:$0xf]
    %v120 = vld [vmem:[#allocation5 + $0xf4] sm:$0xf]
    %v121 = vld [vmem:[#allocation5 + $0xf8] sm:$0xf]
    %v122 = vld [vmem:[#allocation5 + $0xfc] sm:$0xf]
    %v123 = vld [vmem:[#allocation5 + $0x100] sm:$0xf]
    %v124 = vld [vmem:[#allocation5 + $0x104] sm:$0xf]
    %v125 = vld [vmem:[#allocation5 + $0x108] sm:$0xf]
    %v126 = vld [vmem:[#allocation5 + $0x10c] sm:$0xf]
    %v127 = vld [vmem:[#allocation5 + $0x110] sm:$0xf]
    %v128 = vld [vmem:[#allocation5 + $0x114] sm:$0xf]
    %v129 = vld [vmem:[#allocation5 + $0x118] sm:$0xf]
    %v130 = vld [vmem:[#allocation5 + $0x11c] sm:$0xf]
    %v131 = vld [vmem:[#allocation5 + $0x120] sm:$0xf]
    %v132 = vld [vmem:[#allocation5 + $0x124] sm:$0xf]
    %v133 = vld [vmem:[#allocation5 + $0x128] sm:$0xf]
    %v134 = vld [vmem:[#allocation5 + $0x12c] sm:$0xf]
    %v135 = vld [vmem:[#allocation5 + $0x130] sm:$0xf]
    %v136 = vld [vmem:[#allocation5 + $0x134] sm:$0xf]
    %v137 = vld [vmem:[#allocation5 + $0x138] sm:$0xf]
    %v138 = vld [vmem:[#allocation5 + $0x13c] sm:$0xf]
    %v139 = vld [vmem:[#allocation5 + $0x140] sm:$0xf]
    %v140 = vld [vmem:[#allocation5 + $0x144] sm:$0xf]
    %v141 = vld [vmem:[#allocation5 + $0x148] sm:$0xf]
    %v142 = vld [vmem:[#allocation5 + $0x14c] sm:$0xf]
    %v143 = vld [vmem:[#allocation5 + $0x150] sm:$0xf]
    %v144 = vld [vmem:[#allocation5 + $0x154] sm:$0xf]
    %v145 = vld [vmem:[#allocation5 + $0x158] sm:$0xf]
    %v146 = vld [vmem:[#allocation5 + $0x15c] sm:$0xf]
    %v147 = vld [vmem:[#allocation5 + $0x160] sm:$0xf]
    %v148 = vld [vmem:[#allocation5 + $0x164] sm:$0xf]
    %v149 = vld [vmem:[#allocation5 + $0x168] sm:$0xf]
    %v150 = vld [vmem:[#allocation5 + $0x16c] sm:$0xf]
    %v151 = vld [vmem:[#allocation5 + $0x170] sm:$0xf]
    %v152 = vld [vmem:[#allocation5 + $0x174] sm:$0xf]
    %v153 = vld [vmem:[#allocation5 + $0x178] sm:$0xf]
    %v154 = vld [vmem:[#allocation5 + $0x17c] sm:$0xf]
    %v155 = vld [vmem:[#allocation5 + $0x180] sm:$0xf]
    %v156 = vld [vmem:[#allocation5 + $0x184] sm:$0xf]
    %v157 = vld [vmem:[#allocation5 + $0x188] sm:$0xf]
    %v158 = vld [vmem:[#allocation5 + $0x18c] sm:$0xf]
    %v159 = vld [vmem:[#allocation5 + $0x190] sm:$0xf]
    %v160 = vld [vmem:[#allocation5 + $0x194] sm:$0xf]
    %v161 = vld [vmem:[#allocation5 + $0x198] sm:$0xf]
    %v162 = vld [vmem:[#allocation5 + $0x19c] sm:$0xf]
    %v163 = vld [vmem:[#allocation5 + $0x1a0] sm:$0xf]
    %v164 = vld [vmem:[#allocation5 + $0x1a4] sm:$0xf]
    %v165 = vld [vmem:[#allocation5 + $0x1a8] sm:$0xf]
    %v166 = vld [vmem:[#allocation5 + $0x1ac] sm:$0xf]
    %v167 = vld [vmem:[#allocation5 + $0x1b0] sm:$0xf]
    %v168 = vld [vmem:[#allocation5 + $0x1b4] sm:$0xf]
    %v169 = vld [vmem:[#allocation5 + $0x1b8] sm:$0xf]
    %v170 = vld [vmem:[#allocation5 + $0x1bc] sm:$0xf]
    %v171 = vld [vmem:[#allocation5 + $0x1c0] sm:$0xf]
    %v172 = vld [vmem:[#allocation5 + $0x1c4] sm:$0xf]
    %v173 = vld [vmem:[#allocation5 + $0x1c8] sm:$0xf]
    %v174 = vld [vmem:[#allocation5 + $0x1cc] sm:$0xf]
    %v175 = vld [vmem:[#allocation5 + $0x1d0] sm:$0xf]
    %v176 = vld [vmem:[#allocation5 + $0x1d4] sm:$0xf]
    %v177 = vld [vmem:[#allocation5 + $0x1d8] sm:$0xf]
    %v178 = vld [vmem:[#allocation5 + $0x1dc] sm:$0xf]
    %v179 = vld [vmem:[#allocation5 + $0x1e0] sm:$0xf]
    %v180 = vld [vmem:[#allocation5 + $0x1e4] sm:$0xf]
    %v181 = vld [vmem:[#allocation5 + $0x1e8] sm:$0xf]
    %v182 = vld [vmem:[#allocation5 + $0x1ec] sm:$0xf]
    %v183 = vld [vmem:[#allocation5 + $0x1f0] sm:$0xf]
    %v184 = vld [vmem:[#allocation5 + $0x1f4] sm:$0xf]
    %v185 = vld [vmem:[#allocation5 + $0x1f8] sm:$0xf]
    %v186 = vld [vmem:[#allocation5 + $0x1fc] sm:$0xf]
    %v187 = vld [vmem:[%s2] sm:$0x1]
    %v189 = vlaneseq
    %v190 = vshrl.u32 %v189, 7
    %v191 = vsub.s32 0, %v190
    %v192 = vrot.slane %v187, %v191
    %v195 = vcombine.high %v58, %v58
    %v197 = vunpack.c.l.s4 1966171168
    %v198 = vunpack.c.0.s8 %v197
    %v199 = vlaneseq
    %v200 = vshrl.u32 %v199, 7
    %v201 = vsub.s32 %v198, %v200
    %v202 = vrot.slane %v58, %v201
    %v204 = vunpack.c.l.s4 1966171168
    %v205 = vunpack.c.0.s8 %v204
    %v206 = vlaneseq
    %v207 = vshrl.u32 %v206, 7
    %v208 = vsub.s32 %v205, %v207
    %v209 = vrot.slane %v195, %v208
    %v210 = vcombine.high %v202, %v202
    %v211 = vcombine.high %v209, %v209
    %v213 = vunpack.c.l.s4 1966171168
    %v214 = vunpack.c.0.s8 %v213
    %v215 = vlaneseq
    %v216 = vshrl.u32 %v215, 7
    %v217 = vsub.s32 %v214, %v216
    %v218 = vrot.slane %v202, %v217
    %v220 = vunpack.c.l.s4 1966171168
    %v221 = vunpack.c.0.s8 %v220
    %v222 = vlaneseq
    %v223 = vshrl.u32 %v222, 7
    %v224 = vsub.s32 %v221, %v223
    %v225 = vrot.slane %v209, %v224
    %v227 = vunpack.c.l.s4 1966171168
    %v228 = vunpack.c.0.s8 %v227
    %v229 = vlaneseq
    %v230 = vshrl.u32 %v229, 7
    %v231 = vsub.s32 %v228, %v230
    %v232 = vrot.slane %v210, %v231
    %v234 = vunpack.c.l.s4 1966171168
    %v235 = vunpack.c.0.s8 %v234
    %v236 = vlaneseq
    %v237 = vshrl.u32 %v236, 7
    %v238 = vsub.s32 %v235, %v237
    %v239 = vrot.slane %v211, %v238
    %v240 = vcombine.high %v218, %v218
    %v241 = vcombine.high %v225, %v225
    %v242 = vcombine.high %v232, %v232
    %v243 = vcombine.high %v239, %v239
    %v380 = vunpack.c.l.b16 %v59
    %v381 = vunpack.c.l.b16 %v60
    %v382 = vunpack.c.l.b16 %v61
    %v383 = vunpack.c.l.b16 %v62
    %v384 = vunpack.c.l.b16 %v63
    %v385 = vunpack.c.l.b16 %v64
    %v386 = vunpack.c.l.b16 %v65
    %v387 = vunpack.c.l.b16 %v66
    %v388 = vunpack.c.l.b16 %v67
    %v389 = vunpack.c.l.b16 %v68
    %v390 = vunpack.c.l.b16 %v69
    %v391 = vunpack.c.l.b16 %v70
    %v392 = vunpack.c.l.b16 %v71
    %v393 = vunpack.c.l.b16 %v72
    %v394 = vunpack.c.l.b16 %v73
    %v395 = vunpack.c.l.b16 %v74
    %v396 = vunpack.c.l.b16 %v75
    %v397 = vunpack.c.l.b16 %v76
    %v398 = vunpack.c.l.b16 %v77
    %v399 = vunpack.c.l.b16 %v78
    %v400 = vunpack.c.l.b16 %v79
    %v401 = vunpack.c.l.b16 %v80
    %v402 = vunpack.c.l.b16 %v81
    %v403 = vunpack.c.l.b16 %v82
    %v404 = vunpack.c.l.b16 %v83
    %v405 = vunpack.c.l.b16 %v84
    %v406 = vunpack.c.l.b16 %v85
    %v407 = vunpack.c.l.b16 %v86
    %v408 = vunpack.c.l.b16 %v87
    %v409 = vunpack.c.l.b16 %v88
    %v410 = vunpack.c.l.b16 %v89
    %v411 = vunpack.c.l.b16 %v90
    %v412 = vunpack.c.l.b16 %v91
    %v413 = vunpack.c.l.b16 %v92
    %v414 = vunpack.c.l.b16 %v93
    %v415 = vunpack.c.l.b16 %v94
    %v416 = vunpack.c.l.b16 %v95
    %v417 = vunpack.c.l.b16 %v96
    %v418 = vunpack.c.l.b16 %v97
    %v419 = vunpack.c.l.b16 %v98
    %v420 = vunpack.c.l.b16 %v99
    %v421 = vunpack.c.l.b16 %v100
    %v422 = vunpack.c.l.b16 %v101
    %v423 = vunpack.c.l.b16 %v102
    %v424 = vunpack.c.l.b16 %v103
    %v425 = vunpack.c.l.b16 %v104
    %v426 = vunpack.c.l.b16 %v105
    %v427 = vunpack.c.l.b16 %v106
    %v428 = vunpack.c.l.b16 %v107
    %v429 = vunpack.c.l.b16 %v108
    %v430 = vunpack.c.l.b16 %v109
    %v431 = vunpack.c.l.b16 %v110
    %v432 = vunpack.c.l.b16 %v111
    %v433 = vunpack.c.l.b16 %v112
    %v434 = vunpack.c.l.b16 %v113
    %v435 = vunpack.c.l.b16 %v114
    %v436 = vunpack.c.l.b16 %v115
    %v437 = vunpack.c.l.b16 %v116
    %v438 = vunpack.c.l.b16 %v117
    %v439 = vunpack.c.l.b16 %v118
    %v440 = vunpack.c.l.b16 %v119
    %v441 = vunpack.c.l.b16 %v120
    %v442 = vunpack.c.l.b16 %v121
    %v443 = vunpack.c.l.b16 %v122
    %v444 = vunpack.c.l.b16 %v123
    %v445 = vunpack.c.l.b16 %v124
    %v446 = vunpack.c.l.b16 %v125
    %v447 = vunpack.c.l.b16 %v126
    %v448 = vunpack.c.l.b16 %v127
    %v449 = vunpack.c.l.b16 %v128
    %v450 = vunpack.c.l.b16 %v129
    %v451 = vunpack.c.l.b16 %v130
    %v452 = vunpack.c.l.b16 %v131
    %v453 = vunpack.c.l.b16 %v132
    %v454 = vunpack.c.l.b16 %v133
    %v455 = vunpack.c.l.b16 %v134
    %v456 = vunpack.c.l.b16 %v135
    %v457 = vunpack.c.l.b16 %v136
    %v458 = vunpack.c.l.b16 %v137
    %v459 = vunpack.c.l.b16 %v138
    %v460 = vunpack.c.l.b16 %v139
    %v461 = vunpack.c.l.b16 %v140
    %v462 = vunpack.c.l.b16 %v141
    %v463 = vunpack.c.l.b16 %v142
    %v464 = vunpack.c.l.b16 %v143
    %v465 = vunpack.c.l.b16 %v144
    %v466 = vunpack.c.l.b16 %v145
    %v467 = vunpack.c.l.b16 %v146
    %v468 = vunpack.c.l.b16 %v147
    %v469 = vunpack.c.l.b16 %v148
    %v470 = vunpack.c.l.b16 %v149
    %v471 = vunpack.c.l.b16 %v150
    %v472 = vunpack.c.l.b16 %v151
    %v473 = vunpack.c.l.b16 %v152
    %v474 = vunpack.c.l.b16 %v153
    %v475 = vunpack.c.l.b16 %v154
    %v476 = vunpack.c.l.b16 %v155
    %v477 = vunpack.c.l.b16 %v156
    %v478 = vunpack.c.l.b16 %v157
    %v479 = vunpack.c.l.b16 %v158
    %v480 = vunpack.c.l.b16 %v159
    %v481 = vunpack.c.l.b16 %v160
    %v482 = vunpack.c.l.b16 %v161
    %v483 = vunpack.c.l.b16 %v162
    %v484 = vunpack.c.l.b16 %v163
    %v485 = vunpack.c.l.b16 %v164
    %v486 = vunpack.c.l.b16 %v165
    %v487 = vunpack.c.l.b16 %v166
    %v488 = vunpack.c.l.b16 %v167
    %v489 = vunpack.c.l.b16 %v168
    %v490 = vunpack.c.l.b16 %v169
    %v491 = vunpack.c.l.b16 %v170
    %v492 = vunpack.c.l.b16 %v171
    %v493 = vunpack.c.l.b16 %v172
    %v494 = vunpack.c.l.b16 %v173
    %v495 = vunpack.c.l.b16 %v174
    %v496 = vunpack.c.l.b16 %v175
    %v497 = vunpack.c.l.b16 %v176
    %v498 = vunpack.c.l.b16 %v177
    %v499 = vunpack.c.l.b16 %v178
    %v500 = vunpack.c.l.b16 %v179
    %v501 = vunpack.c.l.b16 %v180
    %v502 = vunpack.c.l.b16 %v181
    %v503 = vunpack.c.l.b16 %v182
    %v504 = vunpack.c.l.b16 %v183
    %v505 = vunpack.c.l.b16 %v184
    %v506 = vunpack.c.l.b16 %v185
    %v507 = vunpack.c.l.b16 %v186
    %v508 = vpack.c.b16 %v381, %v380
    %v509 = vpack.c.b16 %v383, %v382
    %v510 = vpack.c.b16 %v385, %v384
    %v511 = vpack.c.b16 %v387, %v386
    %v512 = vpack.c.b16 %v389, %v388
    %v513 = vpack.c.b16 %v391, %v390
    %v514 = vpack.c.b16 %v393, %v392
    %v515 = vpack.c.b16 %v395, %v394
    %v516 = vpack.c.b16 %v397, %v396
    %v517 = vpack.c.b16 %v399, %v398
    %v518 = vpack.c.b16 %v401, %v400
    %v519 = vpack.c.b16 %v403, %v402
    %v520 = vpack.c.b16 %v405, %v404
    %v521 = vpack.c.b16 %v407, %v406
    %v522 = vpack.c.b16 %v409, %v408
    %v523 = vpack.c.b16 %v411, %v410
    %v524 = vpack.c.b16 %v413, %v412
    %v525 = vpack.c.b16 %v415, %v414
    %v526 = vpack.c.b16 %v417, %v416
    %v527 = vpack.c.b16 %v419, %v418
    %v528 = vpack.c.b16 %v421, %v420
    %v529 = vpack.c.b16 %v423, %v422
    %v530 = vpack.c.b16 %v425, %v424
    %v531 = vpack.c.b16 %v427, %v426
    %v532 = vpack.c.b16 %v429, %v428
    %v533 = vpack.c.b16 %v431, %v430
    %v534 = vpack.c.b16 %v433, %v432
    %v535 = vpack.c.b16 %v435, %v434
    %v536 = vpack.c.b16 %v437, %v436
    %v537 = vpack.c.b16 %v439, %v438
    %v538 = vpack.c.b16 %v441, %v440
    %v539 = vpack.c.b16 %v443, %v442
    %v540 = vpack.c.b16 %v445, %v444
    %v541 = vpack.c.b16 %v447, %v446
    %v542 = vpack.c.b16 %v449, %v448
    %v543 = vpack.c.b16 %v451, %v450
    %v544 = vpack.c.b16 %v453, %v452
    %v545 = vpack.c.b16 %v455, %v454
    %v546 = vpack.c.b16 %v457, %v456
    %v547 = vpack.c.b16 %v459, %v458
    %v548 = vpack.c.b16 %v461, %v460
    %v549 = vpack.c.b16 %v463, %v462
    %v550 = vpack.c.b16 %v465, %v464
    %v551 = vpack.c.b16 %v467, %v466
    %v552 = vpack.c.b16 %v469, %v468
    %v553 = vpack.c.b16 %v471, %v470
    %v554 = vpack.c.b16 %v473, %v472
    %v555 = vpack.c.b16 %v475, %v474
    %v556 = vpack.c.b16 %v477, %v476
    %v557 = vpack.c.b16 %v479, %v478
    %v558 = vpack.c.b16 %v481, %v480
    %v559 = vpack.c.b16 %v483, %v482
    %v560 = vpack.c.b16 %v485, %v484
    %v561 = vpack.c.b16 %v487, %v486
    %v562 = vpack.c.b16 %v489, %v488
    %v563 = vpack.c.b16 %v491, %v490
    %v564 = vpack.c.b16 %v493, %v492
    %v565 = vpack.c.b16 %v495, %v494
    %v566 = vpack.c.b16 %v497, %v496
    %v567 = vpack.c.b16 %v499, %v498
    %v568 = vpack.c.b16 %v501, %v500
    %v569 = vpack.c.b16 %v503, %v502
    %v570 = vpack.c.b16 %v505, %v504
    %v571 = vpack.c.b16 %v507, %v506
    %636 = vmatprep.subr.bf16.mxu0 0
    %637 = vmatpush1.bf16.msra.mxu0 %v508
    %638 = vmatprep.subr.bf16.mxu0 0
    %639 = vmatpush1.bf16.msra.mxu0 %v509
    %640 = vmatprep.subr.bf16.mxu0 0
    %641 = vmatpush1.bf16.msra.mxu0 %v510
    %642 = vmatprep.subr.bf16.mxu0 0
    %643 = vmatpush1.bf16.msra.mxu0 %v511
    %644 = vmatprep.subr.bf16.mxu0 0
    %645 = vmatpush1.bf16.msra.mxu0 %v512
    %646 = vmatprep.subr.bf16.mxu0 0
    %647 = vmatpush1.bf16.msra.mxu0 %v513
    %648 = vmatprep.subr.bf16.mxu0 0
    %649 = vmatpush1.bf16.msra.mxu0 %v514
    %650 = vmatprep.subr.bf16.mxu0 0
    %651 = vmatpush1.bf16.msra.mxu0 %v515
    %652 = vmatprep.subr.bf16.mxu0 0
    %653 = vmatpush1.bf16.msra.mxu0 %v516
    %654 = vmatprep.subr.bf16.mxu0 0
    %655 = vmatpush1.bf16.msra.mxu0 %v517
    %656 = vmatprep.subr.bf16.mxu0 0
    %657 = vmatpush1.bf16.msra.mxu0 %v518
    %658 = vmatprep.subr.bf16.mxu0 0
    %659 = vmatpush1.bf16.msra.mxu0 %v519
    %660 = vmatprep.subr.bf16.mxu0 0
    %661 = vmatpush1.bf16.msra.mxu0 %v520
    %662 = vmatprep.subr.bf16.mxu0 0
    %663 = vmatpush1.bf16.msra.mxu0 %v521
    %664 = vmatprep.subr.bf16.mxu0 0
    %665 = vmatpush1.bf16.msra.mxu0 %v522
    %666 = vmatprep.subr.bf16.mxu0 0
    %667 = vmatpush1.bf16.msra.mxu0 %v523
    %668 = vmatprep.mubr.bf16.mxu0 %v232
    %669 = vmatmul.mubr.bf16.gmra.mrb[0].mxu0 %v218
    %v670 = vpop.f32.mrb[0].mxu0
    %v671 = vadd.f32 %v192, %v670
    %v672 = vpop.f32.mrb[0].mxu0
    %v673 = vpop.f32.mrb[0].mxu0
    %v674 = vpop.f32.mrb[0].mxu0
    %675 = vdwg.mxu0
    %676 = vmatprep.subr.bf16.mxu0 0
    %677 = vmatpush1.bf16.msra.mxu0 %v524
    %678 = vmatprep.subr.bf16.mxu0 0
    %679 = vmatpush1.bf16.msra.mxu0 %v525
    %680 = vmatprep.subr.bf16.mxu0 0
    %681 = vmatpush1.bf16.msra.mxu0 %v526
    %682 = vmatprep.subr.bf16.mxu0 0
    %683 = vmatpush1.bf16.msra.mxu0 %v527
    %684 = vmatprep.subr.bf16.mxu0 0
    %685 = vmatpush1.bf16.msra.mxu0 %v528
    %686 = vmatprep.subr.bf16.mxu0 0
    %687 = vmatpush1.bf16.msra.mxu0 %v529
    %688 = vmatprep.subr.bf16.mxu0 0
    %689 = vmatpush1.bf16.msra.mxu0 %v530
    %690 = vmatprep.subr.bf16.mxu0 0
    %691 = vmatpush1.bf16.msra.mxu0 %v531
    %692 = vmatprep.subr.bf16.mxu0 0
    %693 = vmatpush1.bf16.msra.mxu0 %v532
    %694 = vmatprep.subr.bf16.mxu0 0
    %695 = vmatpush1.bf16.msra.mxu0 %v533
    %696 = vmatprep.subr.bf16.mxu0 0
    %697 = vmatpush1.bf16.msra.mxu0 %v534
    %698 = vmatprep.subr.bf16.mxu0 0
    %699 = vmatpush1.bf16.msra.mxu0 %v535
    %700 = vmatprep.subr.bf16.mxu0 0
    %701 = vmatpush1.bf16.msra.mxu0 %v536
    %702 = vmatprep.subr.bf16.mxu0 0
    %703 = vmatpush1.bf16.msra.mxu0 %v537
    %704 = vmatprep.subr.bf16.mxu0 0
    %705 = vmatpush1.bf16.msra.mxu0 %v538
    %706 = vmatprep.subr.bf16.mxu0 0
    %707 = vmatpush1.bf16.msra.mxu0 %v539
    %708 = vmatprep.mubr.bf16.mxu0 %v242
    %709 = vmatmul.mubr.bf16.gmra.mrb[0].mxu0 %v240
    %v710 = vpop.f32.mrb[0].mxu0
    %v711 = vadd.f32 %v671, %v710
    %v712 = vpop.f32.mrb[0].mxu0
    %v713 = vpop.f32.mrb[0].mxu0
    %v714 = vpop.f32.mrb[0].mxu0
    %715 = vdwg.mxu0
    %716 = vmatprep.subr.bf16.mxu0 0
    %717 = vmatpush1.bf16.msra.mxu0 %v540
    %718 = vmatprep.subr.bf16.mxu0 0
    %719 = vmatpush1.bf16.msra.mxu0 %v541
    %720 = vmatprep.subr.bf16.mxu0 0
    %721 = vmatpush1.bf16.msra.mxu0 %v542
    %722 = vmatprep.subr.bf16.mxu0 0
    %723 = vmatpush1.bf16.msra.mxu0 %v543
    %724 = vmatprep.subr.bf16.mxu0 0
    %725 = vmatpush1.bf16.msra.mxu0 %v544
    %726 = vmatprep.subr.bf16.mxu0 0
    %727 = vmatpush1.bf16.msra.mxu0 %v545
    %728 = vmatprep.subr.bf16.mxu0 0
    %729 = vmatpush1.bf16.msra.mxu0 %v546
    %730 = vmatprep.subr.bf16.mxu0 0
    %731 = vmatpush1.bf16.msra.mxu0 %v547
    %732 = vmatprep.subr.bf16.mxu0 0
    %733 = vmatpush1.bf16.msra.mxu0 %v548
    %734 = vmatprep.subr.bf16.mxu0 0
    %735 = vmatpush1.bf16.msra.mxu0 %v549
    %736 = vmatprep.subr.bf16.mxu0 0
    %737 = vmatpush1.bf16.msra.mxu0 %v550
    %738 = vmatprep.subr.bf16.mxu0 0
    %739 = vmatpush1.bf16.msra.mxu0 %v551
    %740 = vmatprep.subr.bf16.mxu0 0
    %741 = vmatpush1.bf16.msra.mxu0 %v552
    %742 = vmatprep.subr.bf16.mxu0 0
    %743 = vmatpush1.bf16.msra.mxu0 %v553
    %744 = vmatprep.subr.bf16.mxu0 0
    %745 = vmatpush1.bf16.msra.mxu0 %v554
    %746 = vmatprep.subr.bf16.mxu0 0
    %747 = vmatpush1.bf16.msra.mxu0 %v555
    %748 = vmatprep.mubr.bf16.mxu0 %v239
    %749 = vmatmul.mubr.bf16.gmra.mrb[0].mxu0 %v225
    %v750 = vpop.f32.mrb[0].mxu0
    %v751 = vadd.f32 %v711, %v750
    %v752 = vpop.f32.mrb[0].mxu0
    %v753 = vpop.f32.mrb[0].mxu0
    %v754 = vpop.f32.mrb[0].mxu0
    %755 = vdwg.mxu0
    %756 = vmatprep.subr.bf16.mxu0 0
    %757 = vmatpush1.bf16.msra.mxu0 %v556
    %758 = vmatprep.subr.bf16.mxu0 0
    %759 = vmatpush1.bf16.msra.mxu0 %v557
    %760 = vmatprep.subr.bf16.mxu0 0
    %761 = vmatpush1.bf16.msra.mxu0 %v558
    %762 = vmatprep.subr.bf16.mxu0 0
    %763 = vmatpush1.bf16.msra.mxu0 %v559
    %764 = vmatprep.subr.bf16.mxu0 0
    %765 = vmatpush1.bf16.msra.mxu0 %v560
    %766 = vmatprep.subr.bf16.mxu0 0
    %767 = vmatpush1.bf16.msra.mxu0 %v561
    %768 = vmatprep.subr.bf16.mxu0 0
    %769 = vmatpush1.bf16.msra.mxu0 %v562
    %770 = vmatprep.subr.bf16.mxu0 0
    %771 = vmatpush1.bf16.msra.mxu0 %v563
    %772 = vmatprep.subr.bf16.mxu0 0
    %773 = vmatpush1.bf16.msra.mxu0 %v564
    %774 = vmatprep.subr.bf16.mxu0 0
    %775 = vmatpush1.bf16.msra.mxu0 %v565
    %776 = vmatprep.subr.bf16.mxu0 0
    %777 = vmatpush1.bf16.msra.mxu0 %v566
    %778 = vmatprep.subr.bf16.mxu0 0
    %779 = vmatpush1.bf16.msra.mxu0 %v567
    %780 = vmatprep.subr.bf16.mxu0 0
    %781 = vmatpush1.bf16.msra.mxu0 %v568
    %782 = vmatprep.subr.bf16.mxu0 0
    %783 = vmatpush1.bf16.msra.mxu0 %v569
    %784 = vmatprep.subr.bf16.mxu0 0
    %785 = vmatpush1.bf16.msra.mxu0 %v570
    %786 = vmatprep.subr.bf16.mxu0 0
    %787 = vmatpush1.bf16.msra.mxu0 %v571
    %788 = vmatprep.mubr.bf16.mxu0 %v243
    %789 = vmatmul.mubr.bf16.gmra.mrb[0].mxu0 %v241
    %v790 = vpop.f32.mrb[0].mxu0
    %v791 = vadd.f32 %v751, %v790
    %v792 = vpop.f32.mrb[0].mxu0
    %v793 = vpop.f32.mrb[0].mxu0
    %v794 = vpop.f32.mrb[0].mxu0
    %795 = vdwg.mxu0
    %v796 = vlaneseq
    %v797 = vand.u32 %v796, 127
    %vm798 = vcmp.ge.s32.totalorder %v797, 0
    %vm799 = vcmp.lt.s32.totalorder %v797, 10
    %vm800 = vmand %vm798, %vm799
    %v801 = vsel %vm800, %v791, -1e+30
    %vm802 = vcmask 1041408
    %v803 = vsel %vm802, %v801, -inf
    %804 = vmax.xlane.f32.xlu0 %v803
    %v805 = vpop.xlane.xlu0 %804
    %v806 = vsub.f32 %v801, %v805
    %v807 = vmul.f32 %v806, 1.442695
    %v808 = vpow.pop %v807
    %v809 = vsel %vm802, %v808, 0.0
    %810 = vadd.xlane.f32.xlu0 %v809
    %v811 = vpop.xlane.xlu0 %810
    %v812 = vrcp.pop %v811
    %v813 = vmul.f32 %v808, %v812
    %vm814 = vcmp.ge.s32.totalorder %v797, 10
    %vm815 = vcmp.lt.s32.totalorder %v797, 20
    %vm816 = vmand %vm814, %vm815
    %v817 = vsel %vm816, %v791, -1e+30
    %v818 = vsel %vm802, %v817, -inf
    %819 = vmax.xlane.f32.xlu0 %v818
    %v820 = vpop.xlane.xlu0 %819
    %v821 = vsub.f32 %v817, %v820
    %v822 = vmul.f32 %v821, 1.442695
    %v823 = vpow.pop %v822
    %v824 = vsel %vm802, %v823, 0.0
    %825 = vadd.xlane.f32.xlu0 %v824
    %v826 = vpop.xlane.xlu0 %825
    %v827 = vrcp.pop %v826
    %v828 = vmul.f32 %v823, %v827
    %v829 = vadd.f32 %v813, %v828
    %vm830 = vcmp.ge.s32.totalorder %v797, 20
    %vm831 = vcmp.lt.s32.totalorder %v797, 30
    %vm832 = vmand %vm830, %vm831
    %v833 = vsel %vm832, %v791, -1e+30
    %v834 = vsel %vm802, %v833, -inf
    %835 = vmax.xlane.f32.xlu0 %v834
    %v836 = vpop.xlane.xlu0 %835
    %v837 = vsub.f32 %v833, %v836
    %v838 = vmul.f32 %v837, 1.442695
    %v839 = vpow.pop %v838
    %v840 = vsel %vm802, %v839, 0.0
    %841 = vadd.xlane.f32.xlu0 %v840
    %v842 = vpop.xlane.xlu0 %841
    %v843 = vrcp.pop %v842
    %v844 = vmul.f32 %v839, %v843
    %v845 = vadd.f32 %v829, %v844
    %v846 = vld [vmem:[#allocation7] sm:$0xff]
    %v847 = vld [vmem:[#allocation7 + $0x8] sm:$0xff]
    %v848 = vld [vmem:[#allocation7 + $0x10] sm:$0xff]
    %v849 = vld [vmem:[#allocation7 + $0x18] sm:$0xff]
    %v850 = vld [vmem:[#allocation7 + $0x20] sm:$0xff]
    %v851 = vld [vmem:[#allocation7 + $0x28] sm:$0xff]
    %v852 = vld [vmem:[#allocation7 + $0x30] sm:$0xff]
    %v853 = vld [vmem:[#allocation7 + $0x38] sm:$0xff]
    %v854 = vld [vmem:[#allocation7 + $0x40] sm:$0xff]
    %v855 = vld [vmem:[#allocation7 + $0x48] sm:$0xff]
    %v856 = vld [vmem:[#allocation7 + $0x50] sm:$0xff]
    %v857 = vld [vmem:[#allocation7 + $0x58] sm:$0xff]
    %v858 = vld [vmem:[#allocation7 + $0x60] sm:$0xff]
    %v859 = vld [vmem:[#allocation7 + $0x68] sm:$0xff]
    %v860 = vld [vmem:[#allocation7 + $0x70] sm:$0xff]
    %v861 = vld [vmem:[#allocation7 + $0x78] sm:$0xff]
    %862 = vmatprep.subr.mxu0 0.0
    %863 = vmatpush1.msra.mxu0 %v846
    %864 = vmatprep.subr.mxu0 0.0
    %865 = vmatpush1.msra.mxu0 %v847
    %866 = vmatprep.subr.mxu0 0.0
    %867 = vmatpush1.msra.mxu0 %v848
    %868 = vmatprep.subr.mxu0 0.0
    %869 = vmatpush1.msra.mxu0 %v849
    %870 = vmatprep.subr.mxu0 0.0
    %871 = vmatpush1.msra.mxu0 %v850
    %872 = vmatprep.subr.mxu0 0.0
    %873 = vmatpush1.msra.mxu0 %v851
    %874 = vmatprep.subr.mxu0 0.0
    %875 = vmatpush1.msra.mxu0 %v852
    %876 = vmatprep.subr.mxu0 0.0
    %877 = vmatpush1.msra.mxu0 %v853
    %878 = vmatprep.subr.mxu0 0.0
    %879 = vmatpush1.msra.mxu0 %v854
    %880 = vmatprep.subr.mxu0 0.0
    %881 = vmatpush1.msra.mxu0 %v855
    %882 = vmatprep.subr.mxu0 0.0
    %883 = vmatpush1.msra.mxu0 %v856
    %884 = vmatprep.subr.mxu0 0.0
    %885 = vmatpush1.msra.mxu0 %v857
    %886 = vmatprep.subr.mxu0 0.0
    %887 = vmatpush1.msra.mxu0 %v858
    %888 = vmatprep.subr.mxu0 0.0
    %889 = vmatpush1.msra.mxu0 %v859
    %890 = vmatprep.subr.mxu0 0.0
    %891 = vmatpush1.msra.mxu0 %v860
    %892 = vmatprep.subr.mxu0 0.0
    %893 = vmatpush1.msra.mxu0 %v861
    %894 = vmatprep.subr.mxu0 0.0
    %895 = vmatpush1.msra.mxu0 0.0
    %896 = vmatprep.subr.mxu0 0.0
    %897 = vmatpush1.msra.mxu0 0.0
    %898 = vmatprep.subr.mxu0 0.0
    %899 = vmatpush1.msra.mxu0 0.0
    %900 = vmatprep.subr.mxu0 0.0
    %901 = vmatpush1.msra.mxu0 0.0
    %902 = vmatprep.subr.mxu0 0.0
    %903 = vmatpush1.msra.mxu0 0.0
    %904 = vmatprep.subr.mxu0 0.0
    %905 = vmatpush1.msra.mxu0 0.0
    %906 = vmatprep.subr.mxu0 0.0
    %907 = vmatpush1.msra.mxu0 0.0
    %908 = vmatprep.subr.mxu0 0.0
    %909 = vmatpush1.msra.mxu0 0.0
    %910 = vmatprep.subr.mxu0 0.0
    %911 = vmatpush1.msra.mxu0 0.0
    %912 = vmatprep.subr.mxu0 0.0
    %913 = vmatpush1.msra.mxu0 0.0
    %914 = vmatprep.subr.mxu0 0.0
    %915 = vmatpush1.msra.mxu0 0.0
    %916 = vmatprep.subr.mxu0 0.0
    %917 = vmatpush1.msra.mxu0 0.0
    %918 = vmatprep.subr.mxu0 0.0
    %919 = vmatpush1.msra.mxu0 0.0
    %920 = vmatprep.subr.mxu0 0.0
    %921 = vmatpush1.msra.mxu0 0.0
    %922 = vmatprep.subr.mxu0 0.0
    %923 = vmatpush1.msra.mxu0 0.0
    %924 = vmatprep.subr.mxu0 0.0
    %925 = vmatpush1.msra.mxu0 0.0
    %926 = vmatprep.mubr.f32.mxu0 0.0
    %927 = vmatmul.mubr.f32.gmra.mrb[0].mxu0 %v845
    %v928 = vpop.f32.mrb[0].mxu0
    %v929 = vadd.f32 0.0, %v928
    %v930 = vpop.f32.mrb[0].mxu0
    %931 = vdwg.mxu0
    %932 = vst [vmem:[#allocation8] sm:$0x3] %v929
    // Predicated region
    $region30: #{tpu_custom_call.1} parent=1 // pred_check
      _
    $region31: #{tpu_custom_call.1} parent=1 // pred_check_branch
      %934 = sbr.rel (0) target = $region33
    $region32: #{tpu_custom_call.1} parent=1 // pred_region
      %s936 = ssub.s32 32, 32
      %937 = vsyncadd [#allocation4], %s936
      %s939 = sshll.u32 [#allocation8], 4
      %s940 = int_to_ptr.vmem [resolvable:$true] %s939
      %942 = dma.vmem_to_hbm [thread:$0]  %s940, 32, %s4, [#allocation4]
    $region33: #{tpu_custom_call.1} parent=1 // pred_fallthru
      _
    // Predicated region
    $region34: #{tpu_custom_call.1} parent=1 // pred_check
      _
    $region35: #{tpu_custom_call.1} parent=1 // pred_check_branch
      %944 = sbr.rel (0) target = $region37
    $region36: #{tpu_custom_call.1} parent=1 // pred_region
      %945 = dma.done [#allocation4], 32
    $region37: #{tpu_custom_call.1} parent=1 // pred_fallthru
      _
    %946 = vsyncpa [#allocation3], 1
    %947 = vsyncpa [#allocation6], 1
    %948 = vsyncpa [#allocation4], 1

</llo_original>
